<compile_context>
chip_gen: v7x
topology: tpu7x:2x2x1
jax: 0.10.0
libtpu: 0.0.40
codegen_flags: <defaults>
</compile_context>

<pallas_src>
import math

import jax
import jax.numpy as jnp
from jax.experimental import pallas as pl
from jax.experimental.pallas import tpu as pltpu


def _round_up(x, m):
    return (x + m - 1) // m * m


def critic_kernel(x_ref, w1_ref, b1_ref, w2_ref, b2_ref, w3_ref, b3_ref, o_ref):
    """Fused 3-layer MLP critic head for one batch tile (batch on lanes).

    x_ref : (S, tb)   state tile, batch on lanes
    w1_ref: (H, S)    layer-1 weight, (out, in)
    b1_ref: (H, 1)
    w2_ref: (H, H)    layer-2 weight, (out, in)
    b2_ref: (H, 1)
    w3_ref: (H, 1)    layer-3 weight
    b3_ref: (1,)      scalar bias in SMEM
    o_ref : (1, tb)   packed, lane-dense value estimates
    """
    x = x_ref[...].astype(jnp.float32)                 # (S, tb)
    S, tb = x.shape
    H = w1_ref.shape[0]

    # ---- Layer 1: tiny K (state_dim) -> VPU broadcast-FMAs across all 128 lanes.
    w1 = w1_ref[...].astype(jnp.float32)               # (H, S)
    h = jnp.zeros((H, tb), jnp.float32)
    for k in range(S):                                  # S is a trace-time constant -> static unroll
        h = h + w1[:, k:k + 1] * x[k:k + 1, :]
    h = jnp.maximum(h + b1_ref[...].astype(jnp.float32), 0.0)

    # ---- Layer 2: H x H.
    if H <= 128:
        # Full-lane-width VPU broadcast-FMAs beat a >93%-padded MXU pass when H is small.
        w2 = w2_ref[...].astype(jnp.float32)            # (H, H), (out, in)
        h2 = jnp.zeros((H, tb), jnp.float32)
        for i in range(H):
            h2 = h2 + w2[:, i:i + 1] * h[i:i + 1, :]
    else:
        # Real matmul -> MXU with f32 accumulation (bf16 weights take the native bf16 path).
        h2 = jnp.dot(w2_ref[...], h.astype(w2_ref.dtype),
                     preferred_element_type=jnp.float32)
    h2 = jnp.maximum(h2 + b2_ref[...].astype(jnp.float32), 0.0)

    # ---- Layer 3: N = 1 -> VPU multiply + sublane (XLU) reduce; result is natively lane-dense.
    v = jnp.sum(h2 * w3_ref[...].astype(jnp.float32), axis=0, keepdims=True)  # (1, tb)
    o_ref[...] = v + b3_ref[0]


def critic_forward(state, params, *, batch_tile=1024, interpret=False):
    """state: (B, state_dim).  Returns (B,) value estimates (the module's squeeze(-1))."""
    w1, b1, w2, b2, w3, b3 = params
    B, S = state.shape
    H = w1.shape[1]

    # --- Batch tiling: lane-multiples, big tiles (per-step overhead ~0.35us), but keep >= 2 tiles
    #     when the batch allows so a 2-TensorCore (v7x) chip can split the grid.
    b_lanes = _round_up(B, 128)
    tb = min(_round_up(max(batch_tile, 128), 128), b_lanes)
    if b_lanes > 128 and b_lanes <= tb:                 # would otherwise collapse to a single tile
        tb = _round_up(-(-b_lanes // 2), 128)
    b_pad = _round_up(B, tb)
    n_tiles = b_pad // tb

    # Batch-on-lanes: pad the batch and transpose the state to (S, b_pad).
    state_t = jnp.pad(state, ((0, b_pad - B), (0, 0))).T

    # Re-orient params for the batch-on-lanes kernel (hidden dim on sublanes).
    w1_k = w1.T                                         # (H, S)
    b1_k = jnp.reshape(b1, (H, 1))
    w2_k = w2.T                                         # (H, H), (out, in)
    b2_k = jnp.reshape(b2, (H, 1))
    w3_k = jnp.reshape(w3, (H, 1))
    b3_k = jnp.asarray(b3, jnp.float32).reshape((1,))   # 1-D scalar for SMEM (2-D SMEM pads to 4 KiB)

    # Weights/biases stay resident across all batch tiles (constant block index -> no re-DMA).
    def resident(arr):
        return pl.BlockSpec(arr.shape, lambda i: (0,) * arr.ndim)

    flops = 2 * b_pad * (S * H + H * H + H)
    bytes_accessed = (
        b_pad * S * state.dtype.itemsize                                    # streamed state tiles
        + sum(int(a.size) * a.dtype.itemsize for a in (w1_k, b1_k, w2_k, b2_k, w3_k))
        + 4                                                                 # b3 scalar
        + b_pad * 4                                                         # packed output writeback
    )

    out = pl.pallas_call(
        critic_kernel,
        out_shape=jax.ShapeDtypeStruct((1, b_pad), jnp.float32),
        grid=(n_tiles,),
        in_specs=[
            pl.BlockSpec((S, tb), lambda i: (0, i)),                        # state: streamed over batch tiles
            resident(w1_k), resident(b1_k),
            resident(w2_k), resident(b2_k),
            resident(w3_k),
            pl.BlockSpec(memory_space=pltpu.MemorySpace.SMEM),              # b3: single scalar in SMEM
        ],
        out_specs=pl.BlockSpec((1, tb), lambda i: (0, i)),                  # packed lane-dense output
        compiler_params=pltpu.CompilerParams(
            # Batch tiles are independent.  On v7x, pltpu.CORE_PARALLEL can be used here to force
            # an explicit 2-TensorCore split of the batch axis.
            dimension_semantics=("parallel",),
        ),
        cost_estimate=pl.CostEstimate(
            flops=flops, transcendentals=0, bytes_accessed=bytes_accessed),
        interpret=interpret,
    )(state_t, w1_k, b1_k, w2_k, b2_k, w3_k, b3_k)

    return out[0, :B]  # squeeze(-1): one value per example, padding dropped


def kaiming_uniform(key, fan_in, fan_out):
    """PyTorch kaiming_uniform_(nonlinearity='relu') on a (out,in) weight, stored here as (in,out)."""
    bound = math.sqrt(2.0) * math.sqrt(3.0 / fan_in)  # gain * sqrt(3 / fan_in)
    return jax.random.uniform(key, (fan_in, fan_out), jnp.float32, minval=-bound, maxval=bound)


def init_critic_params(key, state_dim, hidden_dim):
    """Matches Critic.init_weights(): kaiming_uniform (relu gain) weights, zero biases."""
    k1, k2, k3 = jax.random.split(key, 3)
    w1 = kaiming_uniform(k1, state_dim, hidden_dim)
    b1 = jnp.zeros((1, hidden_dim), jnp.float32)
    w2 = kaiming_uniform(k2, hidden_dim, hidden_dim)
    b2 = jnp.zeros((1, hidden_dim), jnp.float32)
    w3 = kaiming_uniform(k3, hidden_dim, 1)
    b3 = jnp.zeros((1, 1), jnp.float32)
    return (w1, b1, w2, b2, w3, b3)


def critic_ref(state, params):
    """Pure-JAX reference (full-precision matmuls) for the correctness check."""
    w1, b1, w2, b2, w3, b3 = params
    f32 = lambda a: jnp.asarray(a, jnp.float32)
    hp = jax.lax.Precision.HIGHEST
    h1 = jnp.maximum(jnp.dot(f32(state), f32(w1), precision=hp) + f32(b1), 0.0)
    h2 = jnp.maximum(jnp.dot(h1, f32(w2), precision=hp) + f32(b2), 0.0)
    return (jnp.dot(h2, f32(w3), precision=hp) + f32(b3))[:, 0]


if __name__ == "__main__":
    key = jax.random.PRNGKey(0)
    state_dim, hidden_dim = 4, 32

    pkey, bkey, skey1, skey2, skey3 = jax.random.split(key, 5)
    w1, b1, w2, b2, w3, b3 = init_critic_params(pkey, state_dim, hidden_dim)
    # The module zero-inits biases; randomize them here only so the bias adds are
    # numerically exercised by the check (forward math is identical).
    kb1, kb2, kb3 = jax.random.split(bkey, 3)
    b1 = 0.1 * jax.random.normal(kb1, b1.shape, jnp.float32)
    b2 = 0.1 * jax.random.normal(kb2, b2.shape, jnp.float32)
    b3 = 0.1 * jax.random.normal(kb3, b3.shape, jnp.float32)
    params = (w1, b1, w2, b2, w3, b3)

    # --- 1) Small batch, f32 weights (single tile) ---
    batch = 8
    state = jax.random.normal(skey1, (batch, state_dim), jnp.float32)
    out = jax.block_until_ready(critic_forward(state, params))
    ref = critic_ref(state, params)
    assert out.shape == (batch,), out.shape
    assert jnp.allclose(out, ref, atol=1e-4, rtol=1e-4), float(jnp.max(jnp.abs(out - ref)))

    # --- 2) Ragged batch, bf16 weights (2-tile split + batch-padding path) ---
    batch2 = 300
    state2 = jax.random.normal(skey2, (batch2, state_dim), jnp.float32)
    params_bf16 = (w1.astype(jnp.bfloat16), b1,
                   w2.astype(jnp.bfloat16), b2,
                   w3.astype(jnp.bfloat16), b3)
    out2 = jax.block_until_ready(critic_forward(state2, params_bf16))
    ref2 = critic_ref(state2, params_bf16)
    assert out2.shape == (batch2,), out2.shape
    assert jnp.allclose(out2, ref2, atol=1e-3, rtol=1e-3), float(jnp.max(jnp.abs(out2 - ref2)))

    # --- 3) Larger batch, multi-tile grid at the default tb=1024 ---
    batch3 = 2500
    state3 = jax.random.normal(skey3, (batch3, state_dim), jnp.float32)
    out3 = jax.block_until_ready(critic_forward(state3, params, batch_tile=1024))
    ref3 = critic_ref(state3, params)
    assert out3.shape == (batch3,), out3.shape
    assert jnp.allclose(out3, ref3, atol=1e-4, rtol=1e-4), float(jnp.max(jnp.abs(out3 - ref3)))

    print("KERNEL_OK")
</pallas_src>

<mosaic_0001>
module attributes {stable_mosaic.version = 11 : i64} {
  func.func @critic_kernel(%arg0: i32, %arg1: memref<4x128xf32, #tpu.memory_space<vmem>>, %arg2: memref<32x4xf32, #tpu.memory_space<vmem>>, %arg3: memref<32x1xf32, #tpu.memory_space<vmem>>, %arg4: memref<32x32xf32, #tpu.memory_space<vmem>>, %arg5: memref<32x1xf32, #tpu.memory_space<vmem>>, %arg6: memref<32x1xf32, #tpu.memory_space<vmem>>, %arg7: memref<1xf32, #tpu.memory_space<smem>>, %arg8: memref<1x128xf32, #tpu.memory_space<vmem>>) attributes {dimension_semantics = [#tpu.dimension_semantics<parallel>], iteration_bounds = array<i64: 1>, scalar_prefetch = 0 : i64, scratch_operands = 0 : i64, tpu.core_type = #tpu.core_type<tc>, window_params = [{transform_indices = @transform_0, window_bounds = array<i64: 4, 128>}, {pipeline_mode = #tpu.pipeline_mode<synchronous>, transform_indices = @transform_1, window_bounds = array<i64: 32, 4>}, {pipeline_mode = #tpu.pipeline_mode<synchronous>, transform_indices = @transform_2, window_bounds = array<i64: 32, 1>}, {pipeline_mode = #tpu.pipeline_mode<synchronous>, transform_indices = @transform_3, window_bounds = array<i64: 32, 32>}, {pipeline_mode = #tpu.pipeline_mode<synchronous>, transform_indices = @transform_4, window_bounds = array<i64: 32, 1>}, {pipeline_mode = #tpu.pipeline_mode<synchronous>, transform_indices = @transform_5, window_bounds = array<i64: 32, 1>}, {transform_indices = @transform_6, window_bounds = array<i64: 1>}, {transform_indices = @transform_7, window_bounds = array<i64: 1, 128>}]} {
    %c0 = arith.constant 0 : index
    %c0_0 = arith.constant 0 : index
    %0 = vector.load %arg1[%c0, %c0_0] : memref<4x128xf32, #tpu.memory_space<vmem>>, vector<4x128xf32>
    %c0_1 = arith.constant 0 : index
    %c0_2 = arith.constant 0 : index
    %1 = vector.load %arg2[%c0_1, %c0_2] : memref<32x4xf32, #tpu.memory_space<vmem>>, vector<32x4xf32>
    %cst = arith.constant 0.000000e+00 : f32
    %2 = vector.broadcast %cst : f32 to vector<32x128xf32>
    %3 = vector.extract_strided_slice %1 {offsets = [0, 0], sizes = [32, 1], strides = [1, 1]} : vector<32x4xf32> to vector<32x1xf32>
    %4 = vector.extract_strided_slice %0 {offsets = [0, 0], sizes = [1, 128], strides = [1, 1]} : vector<4x128xf32> to vector<1x128xf32>
    %5 = vector.broadcast %3 : vector<32x1xf32> to vector<32x128xf32>
    %6 = vector.broadcast %4 : vector<1x128xf32> to vector<32x128xf32>
    %7 = arith.mulf %5, %6 : vector<32x128xf32>
    %8 = arith.addf %2, %7 : vector<32x128xf32>
    %9 = vector.extract_strided_slice %1 {offsets = [0, 1], sizes = [32, 1], strides = [1, 1]} : vector<32x4xf32> to vector<32x1xf32>
    %10 = vector.extract_strided_slice %0 {offsets = [1, 0], sizes = [1, 128], strides = [1, 1]} : vector<4x128xf32> to vector<1x128xf32>
    %11 = vector.broadcast %9 : vector<32x1xf32> to vector<32x128xf32>
    %12 = vector.broadcast %10 : vector<1x128xf32> to vector<32x128xf32>
    %13 = arith.mulf %11, %12 : vector<32x128xf32>
    %14 = arith.addf %8, %13 : vector<32x128xf32>
    %15 = vector.extract_strided_slice %1 {offsets = [0, 2], sizes = [32, 1], strides = [1, 1]} : vector<32x4xf32> to vector<32x1xf32>
    %16 = vector.extract_strided_slice %0 {offsets = [2, 0], sizes = [1, 128], strides = [1, 1]} : vector<4x128xf32> to vector<1x128xf32>
    %17 = vector.broadcast %15 : vector<32x1xf32> to vector<32x128xf32>
    %18 = vector.broadcast %16 : vector<1x128xf32> to vector<32x128xf32>
    %19 = arith.mulf %17, %18 : vector<32x128xf32>
    %20 = arith.addf %14, %19 : vector<32x128xf32>
    %21 = vector.extract_strided_slice %1 {offsets = [0, 3], sizes = [32, 1], strides = [1, 1]} : vector<32x4xf32> to vector<32x1xf32>
    %22 = vector.extract_strided_slice %0 {offsets = [3, 0], sizes = [1, 128], strides = [1, 1]} : vector<4x128xf32> to vector<1x128xf32>
    %23 = vector.broadcast %21 : vector<32x1xf32> to vector<32x128xf32>
    %24 = vector.broadcast %22 : vector<1x128xf32> to vector<32x128xf32>
    %25 = arith.mulf %23, %24 : vector<32x128xf32>
    %26 = arith.addf %20, %25 : vector<32x128xf32>
    %c0_3 = arith.constant 0 : index
    %c0_4 = arith.constant 0 : index
    %27 = vector.load %arg3[%c0_3, %c0_4] : memref<32x1xf32, #tpu.memory_space<vmem>>, vector<32x1xf32>
    %28 = vector.broadcast %27 : vector<32x1xf32> to vector<32x128xf32>
    %29 = arith.addf %26, %28 : vector<32x128xf32>
    %cst_5 = arith.constant 0.000000e+00 : f32
    %30 = vector.broadcast %cst_5 : f32 to vector<32x128xf32>
    %31 = arith.maximumf %29, %30 : vector<32x128xf32>
    %c0_6 = arith.constant 0 : index
    %c0_7 = arith.constant 0 : index
    %32 = vector.load %arg4[%c0_6, %c0_7] : memref<32x32xf32, #tpu.memory_space<vmem>>, vector<32x32xf32>
    %cst_8 = arith.constant 0.000000e+00 : f32
    %33 = vector.broadcast %cst_8 : f32 to vector<32x128xf32>
    %34 = vector.extract_strided_slice %32 {offsets = [0, 0], sizes = [32, 1], strides = [1, 1]} : vector<32x32xf32> to vector<32x1xf32>
    %35 = vector.extract_strided_slice %31 {offsets = [0, 0], sizes = [1, 128], strides = [1, 1]} : vector<32x128xf32> to vector<1x128xf32>
    %36 = vector.broadcast %34 : vector<32x1xf32> to vector<32x128xf32>
    %37 = vector.broadcast %35 : vector<1x128xf32> to vector<32x128xf32>
    %38 = arith.mulf %36, %37 : vector<32x128xf32>
    %39 = arith.addf %33, %38 : vector<32x128xf32>
    %40 = vector.extract_strided_slice %32 {offsets = [0, 1], sizes = [32, 1], strides = [1, 1]} : vector<32x32xf32> to vector<32x1xf32>
    %41 = vector.extract_strided_slice %31 {offsets = [1, 0], sizes = [1, 128], strides = [1, 1]} : vector<32x128xf32> to vector<1x128xf32>
    %42 = vector.broadcast %40 : vector<32x1xf32> to vector<32x128xf32>
    %43 = vector.broadcast %41 : vector<1x128xf32> to vector<32x128xf32>
    %44 = arith.mulf %42, %43 : vector<32x128xf32>
    %45 = arith.addf %39, %44 : vector<32x128xf32>
    %46 = vector.extract_strided_slice %32 {offsets = [0, 2], sizes = [32, 1], strides = [1, 1]} : vector<32x32xf32> to vector<32x1xf32>
    %47 = vector.extract_strided_slice %31 {offsets = [2, 0], sizes = [1, 128], strides = [1, 1]} : vector<32x128xf32> to vector<1x128xf32>
    %48 = vector.broadcast %46 : vector<32x1xf32> to vector<32x128xf32>
    %49 = vector.broadcast %47 : vector<1x128xf32> to vector<32x128xf32>
    %50 = arith.mulf %48, %49 : vector<32x128xf32>
    %51 = arith.addf %45, %50 : vector<32x128xf32>
    %52 = vector.extract_strided_slice %32 {offsets = [0, 3], sizes = [32, 1], strides = [1, 1]} : vector<32x32xf32> to vector<32x1xf32>
    %53 = vector.extract_strided_slice %31 {offsets = [3, 0], sizes = [1, 128], strides = [1, 1]} : vector<32x128xf32> to vector<1x128xf32>
    %54 = vector.broadcast %52 : vector<32x1xf32> to vector<32x128xf32>
    %55 = vector.broadcast %53 : vector<1x128xf32> to vector<32x128xf32>
    %56 = arith.mulf %54, %55 : vector<32x128xf32>
    %57 = arith.addf %51, %56 : vector<32x128xf32>
    %58 = vector.extract_strided_slice %32 {offsets = [0, 4], sizes = [32, 1], strides = [1, 1]} : vector<32x32xf32> to vector<32x1xf32>
    %59 = vector.extract_strided_slice %31 {offsets = [4, 0], sizes = [1, 128], strides = [1, 1]} : vector<32x128xf32> to vector<1x128xf32>
    %60 = vector.broadcast %58 : vector<32x1xf32> to vector<32x128xf32>
    %61 = vector.broadcast %59 : vector<1x128xf32> to vector<32x128xf32>
    %62 = arith.mulf %60, %61 : vector<32x128xf32>
    %63 = arith.addf %57, %62 : vector<32x128xf32>
    %64 = vector.extract_strided_slice %32 {offsets = [0, 5], sizes = [32, 1], strides = [1, 1]} : vector<32x32xf32> to vector<32x1xf32>
    %65 = vector.extract_strided_slice %31 {offsets = [5, 0], sizes = [1, 128], strides = [1, 1]} : vector<32x128xf32> to vector<1x128xf32>
    %66 = vector.broadcast %64 : vector<32x1xf32> to vector<32x128xf32>
    %67 = vector.broadcast %65 : vector<1x128xf32> to vector<32x128xf32>
    %68 = arith.mulf %66, %67 : vector<32x128xf32>
    %69 = arith.addf %63, %68 : vector<32x128xf32>
    %70 = vector.extract_strided_slice %32 {offsets = [0, 6], sizes = [32, 1], strides = [1, 1]} : vector<32x32xf32> to vector<32x1xf32>
    %71 = vector.extract_strided_slice %31 {offsets = [6, 0], sizes = [1, 128], strides = [1, 1]} : vector<32x128xf32> to vector<1x128xf32>
    %72 = vector.broadcast %70 : vector<32x1xf32> to vector<32x128xf32>
    %73 = vector.broadcast %71 : vector<1x128xf32> to vector<32x128xf32>
    %74 = arith.mulf %72, %73 : vector<32x128xf32>
    %75 = arith.addf %69, %74 : vector<32x128xf32>
    %76 = vector.extract_strided_slice %32 {offsets = [0, 7], sizes = [32, 1], strides = [1, 1]} : vector<32x32xf32> to vector<32x1xf32>
    %77 = vector.extract_strided_slice %31 {offsets = [7, 0], sizes = [1, 128], strides = [1, 1]} : vector<32x128xf32> to vector<1x128xf32>
    %78 = vector.broadcast %76 : vector<32x1xf32> to vector<32x128xf32>
    %79 = vector.broadcast %77 : vector<1x128xf32> to vector<32x128xf32>
    %80 = arith.mulf %78, %79 : vector<32x128xf32>
    %81 = arith.addf %75, %80 : vector<32x128xf32>
    %82 = vector.extract_strided_slice %32 {offsets = [0, 8], sizes = [32, 1], strides = [1, 1]} : vector<32x32xf32> to vector<32x1xf32>
    %83 = vector.extract_strided_slice %31 {offsets = [8, 0], sizes = [1, 128], strides = [1, 1]} : vector<32x128xf32> to vector<1x128xf32>
    %84 = vector.broadcast %82 : vector<32x1xf32> to vector<32x128xf32>
    %85 = vector.broadcast %83 : vector<1x128xf32> to vector<32x128xf32>
    %86 = arith.mulf %84, %85 : vector<32x128xf32>
    %87 = arith.addf %81, %86 : vector<32x128xf32>
    %88 = vector.extract_strided_slice %32 {offsets = [0, 9], sizes = [32, 1], strides = [1, 1]} : vector<32x32xf32> to vector<32x1xf32>
    %89 = vector.extract_strided_slice %31 {offsets = [9, 0], sizes = [1, 128], strides = [1, 1]} : vector<32x128xf32> to vector<1x128xf32>
    %90 = vector.broadcast %88 : vector<32x1xf32> to vector<32x128xf32>
    %91 = vector.broadcast %89 : vector<1x128xf32> to vector<32x128xf32>
    %92 = arith.mulf %90, %91 : vector<32x128xf32>
    %93 = arith.addf %87, %92 : vector<32x128xf32>
    %94 = vector.extract_strided_slice %32 {offsets = [0, 10], sizes = [32, 1], strides = [1, 1]} : vector<32x32xf32> to vector<32x1xf32>
    %95 = vector.extract_strided_slice %31 {offsets = [10, 0], sizes = [1, 128], strides = [1, 1]} : vector<32x128xf32> to vector<1x128xf32>
    %96 = vector.broadcast %94 : vector<32x1xf32> to vector<32x128xf32>
    %97 = vector.broadcast %95 : vector<1x128xf32> to vector<32x128xf32>
    %98 = arith.mulf %96, %97 : vector<32x128xf32>
    %99 = arith.addf %93, %98 : vector<32x128xf32>
    %100 = vector.extract_strided_slice %32 {offsets = [0, 11], sizes = [32, 1], strides = [1, 1]} : vector<32x32xf32> to vector<32x1xf32>
    %101 = vector.extract_strided_slice %31 {offsets = [11, 0], sizes = [1, 128], strides = [1, 1]} : vector<32x128xf32> to vector<1x128xf32>
    %102 = vector.broadcast %100 : vector<32x1xf32> to vector<32x128xf32>
    %103 = vector.broadcast %101 : vector<1x128xf32> to vector<32x128xf32>
    %104 = arith.mulf %102, %103 : vector<32x128xf32>
    %105 = arith.addf %99, %104 : vector<32x128xf32>
    %106 = vector.extract_strided_slice %32 {offsets = [0, 12], sizes = [32, 1], strides = [1, 1]} : vector<32x32xf32> to vector<32x1xf32>
    %107 = vector.extract_strided_slice %31 {offsets = [12, 0], sizes = [1, 128], strides = [1, 1]} : vector<32x128xf32> to vector<1x128xf32>
    %108 = vector.broadcast %106 : vector<32x1xf32> to vector<32x128xf32>
    %109 = vector.broadcast %107 : vector<1x128xf32> to vector<32x128xf32>
    %110 = arith.mulf %108, %109 : vector<32x128xf32>
    %111 = arith.addf %105, %110 : vector<32x128xf32>
    %112 = vector.extract_strided_slice %32 {offsets = [0, 13], sizes = [32, 1], strides = [1, 1]} : vector<32x32xf32> to vector<32x1xf32>
    %113 = vector.extract_strided_slice %31 {offsets = [13, 0], sizes = [1, 128], strides = [1, 1]} : vector<32x128xf32> to vector<1x128xf32>
    %114 = vector.broadcast %112 : vector<32x1xf32> to vector<32x128xf32>
    %115 = vector.broadcast %113 : vector<1x128xf32> to vector<32x128xf32>
    %116 = arith.mulf %114, %115 : vector<32x128xf32>
    %117 = arith.addf %111, %116 : vector<32x128xf32>
    %118 = vector.extract_strided_slice %32 {offsets = [0, 14], sizes = [32, 1], strides = [1, 1]} : vector<32x32xf32> to vector<32x1xf32>
    %119 = vector.extract_strided_slice %31 {offsets = [14, 0], sizes = [1, 128], strides = [1, 1]} : vector<32x128xf32> to vector<1x128xf32>
    %120 = vector.broadcast %118 : vector<32x1xf32> to vector<32x128xf32>
    %121 = vector.broadcast %119 : vector<1x128xf32> to vector<32x128xf32>
    %122 = arith.mulf %120, %121 : vector<32x128xf32>
    %123 = arith.addf %117, %122 : vector<32x128xf32>
    %124 = vector.extract_strided_slice %32 {offsets = [0, 15], sizes = [32, 1], strides = [1, 1]} : vector<32x32xf32> to vector<32x1xf32>
    %125 = vector.extract_strided_slice %31 {offsets = [15, 0], sizes = [1, 128], strides = [1, 1]} : vector<32x128xf32> to vector<1x128xf32>
    %126 = vector.broadcast %124 : vector<32x1xf32> to vector<32x128xf32>
    %127 = vector.broadcast %125 : vector<1x128xf32> to vector<32x128xf32>
    %128 = arith.mulf %126, %127 : vector<32x128xf32>
    %129 = arith.addf %123, %128 : vector<32x128xf32>
    %130 = vector.extract_strided_slice %32 {offsets = [0, 16], sizes = [32, 1], strides = [1, 1]} : vector<32x32xf32> to vector<32x1xf32>
    %131 = vector.extract_strided_slice %31 {offsets = [16, 0], sizes = [1, 128], strides = [1, 1]} : vector<32x128xf32> to vector<1x128xf32>
    %132 = vector.broadcast %130 : vector<32x1xf32> to vector<32x128xf32>
    %133 = vector.broadcast %131 : vector<1x128xf32> to vector<32x128xf32>
    %134 = arith.mulf %132, %133 : vector<32x128xf32>
    %135 = arith.addf %129, %134 : vector<32x128xf32>
    %136 = vector.extract_strided_slice %32 {offsets = [0, 17], sizes = [32, 1], strides = [1, 1]} : vector<32x32xf32> to vector<32x1xf32>
    %137 = vector.extract_strided_slice %31 {offsets = [17, 0], sizes = [1, 128], strides = [1, 1]} : vector<32x128xf32> to vector<1x128xf32>
    %138 = vector.broadcast %136 : vector<32x1xf32> to vector<32x128xf32>
    %139 = vector.broadcast %137 : vector<1x128xf32> to vector<32x128xf32>
    %140 = arith.mulf %138, %139 : vector<32x128xf32>
    %141 = arith.addf %135, %140 : vector<32x128xf32>
    %142 = vector.extract_strided_slice %32 {offsets = [0, 18], sizes = [32, 1], strides = [1, 1]} : vector<32x32xf32> to vector<32x1xf32>
    %143 = vector.extract_strided_slice %31 {offsets = [18, 0], sizes = [1, 128], strides = [1, 1]} : vector<32x128xf32> to vector<1x128xf32>
    %144 = vector.broadcast %142 : vector<32x1xf32> to vector<32x128xf32>
    %145 = vector.broadcast %143 : vector<1x128xf32> to vector<32x128xf32>
    %146 = arith.mulf %144, %145 : vector<32x128xf32>
    %147 = arith.addf %141, %146 : vector<32x128xf32>
    %148 = vector.extract_strided_slice %32 {offsets = [0, 19], sizes = [32, 1], strides = [1, 1]} : vector<32x32xf32> to vector<32x1xf32>
    %149 = vector.extract_strided_slice %31 {offsets = [19, 0], sizes = [1, 128], strides = [1, 1]} : vector<32x128xf32> to vector<1x128xf32>
    %150 = vector.broadcast %148 : vector<32x1xf32> to vector<32x128xf32>
    %151 = vector.broadcast %149 : vector<1x128xf32> to vector<32x128xf32>
    %152 = arith.mulf %150, %151 : vector<32x128xf32>
    %153 = arith.addf %147, %152 : vector<32x128xf32>
    %154 = vector.extract_strided_slice %32 {offsets = [0, 20], sizes = [32, 1], strides = [1, 1]} : vector<32x32xf32> to vector<32x1xf32>
    %155 = vector.extract_strided_slice %31 {offsets = [20, 0], sizes = [1, 128], strides = [1, 1]} : vector<32x128xf32> to vector<1x128xf32>
    %156 = vector.broadcast %154 : vector<32x1xf32> to vector<32x128xf32>
    %157 = vector.broadcast %155 : vector<1x128xf32> to vector<32x128xf32>
    %158 = arith.mulf %156, %157 : vector<32x128xf32>
    %159 = arith.addf %153, %158 : vector<32x128xf32>
    %160 = vector.extract_strided_slice %32 {offsets = [0, 21], sizes = [32, 1], strides = [1, 1]} : vector<32x32xf32> to vector<32x1xf32>
    %161 = vector.extract_strided_slice %31 {offsets = [21, 0], sizes = [1, 128], strides = [1, 1]} : vector<32x128xf32> to vector<1x128xf32>
    %162 = vector.broadcast %160 : vector<32x1xf32> to vector<32x128xf32>
    %163 = vector.broadcast %161 : vector<1x128xf32> to vector<32x128xf32>
    %164 = arith.mulf %162, %163 : vector<32x128xf32>
    %165 = arith.addf %159, %164 : vector<32x128xf32>
    %166 = vector.extract_strided_slice %32 {offsets = [0, 22], sizes = [32, 1], strides = [1, 1]} : vector<32x32xf32> to vector<32x1xf32>
    %167 = vector.extract_strided_slice %31 {offsets = [22, 0], sizes = [1, 128], strides = [1, 1]} : vector<32x128xf32> to vector<1x128xf32>
    %168 = vector.broadcast %166 : vector<32x1xf32> to vector<32x128xf32>
    %169 = vector.broadcast %167 : vector<1x128xf32> to vector<32x128xf32>
    %170 = arith.mulf %168, %169 : vector<32x128xf32>
    %171 = arith.addf %165, %170 : vector<32x128xf32>
    %172 = vector.extract_strided_slice %32 {offsets = [0, 23], sizes = [32, 1], strides = [1, 1]} : vector<32x32xf32> to vector<32x1xf32>
    %173 = vector.extract_strided_slice %31 {offsets = [23, 0], sizes = [1, 128], strides = [1, 1]} : vector<32x128xf32> to vector<1x128xf32>
    %174 = vector.broadcast %172 : vector<32x1xf32> to vector<32x128xf32>
    %175 = vector.broadcast %173 : vector<1x128xf32> to vector<32x128xf32>
    %176 = arith.mulf %174, %175 : vector<32x128xf32>
    %177 = arith.addf %171, %176 : vector<32x128xf32>
    %178 = vector.extract_strided_slice %32 {offsets = [0, 24], sizes = [32, 1], strides = [1, 1]} : vector<32x32xf32> to vector<32x1xf32>
    %179 = vector.extract_strided_slice %31 {offsets = [24, 0], sizes = [1, 128], strides = [1, 1]} : vector<32x128xf32> to vector<1x128xf32>
    %180 = vector.broadcast %178 : vector<32x1xf32> to vector<32x128xf32>
    %181 = vector.broadcast %179 : vector<1x128xf32> to vector<32x128xf32>
    %182 = arith.mulf %180, %181 : vector<32x128xf32>
    %183 = arith.addf %177, %182 : vector<32x128xf32>
    %184 = vector.extract_strided_slice %32 {offsets = [0, 25], sizes = [32, 1], strides = [1, 1]} : vector<32x32xf32> to vector<32x1xf32>
    %185 = vector.extract_strided_slice %31 {offsets = [25, 0], sizes = [1, 128], strides = [1, 1]} : vector<32x128xf32> to vector<1x128xf32>
    %186 = vector.broadcast %184 : vector<32x1xf32> to vector<32x128xf32>
    %187 = vector.broadcast %185 : vector<1x128xf32> to vector<32x128xf32>
    %188 = arith.mulf %186, %187 : vector<32x128xf32>
    %189 = arith.addf %183, %188 : vector<32x128xf32>
    %190 = vector.extract_strided_slice %32 {offsets = [0, 26], sizes = [32, 1], strides = [1, 1]} : vector<32x32xf32> to vector<32x1xf32>
    %191 = vector.extract_strided_slice %31 {offsets = [26, 0], sizes = [1, 128], strides = [1, 1]} : vector<32x128xf32> to vector<1x128xf32>
    %192 = vector.broadcast %190 : vector<32x1xf32> to vector<32x128xf32>
    %193 = vector.broadcast %191 : vector<1x128xf32> to vector<32x128xf32>
    %194 = arith.mulf %192, %193 : vector<32x128xf32>
    %195 = arith.addf %189, %194 : vector<32x128xf32>
    %196 = vector.extract_strided_slice %32 {offsets = [0, 27], sizes = [32, 1], strides = [1, 1]} : vector<32x32xf32> to vector<32x1xf32>
    %197 = vector.extract_strided_slice %31 {offsets = [27, 0], sizes = [1, 128], strides = [1, 1]} : vector<32x128xf32> to vector<1x128xf32>
    %198 = vector.broadcast %196 : vector<32x1xf32> to vector<32x128xf32>
    %199 = vector.broadcast %197 : vector<1x128xf32> to vector<32x128xf32>
    %200 = arith.mulf %198, %199 : vector<32x128xf32>
    %201 = arith.addf %195, %200 : vector<32x128xf32>
    %202 = vector.extract_strided_slice %32 {offsets = [0, 28], sizes = [32, 1], strides = [1, 1]} : vector<32x32xf32> to vector<32x1xf32>
    %203 = vector.extract_strided_slice %31 {offsets = [28, 0], sizes = [1, 128], strides = [1, 1]} : vector<32x128xf32> to vector<1x128xf32>
    %204 = vector.broadcast %202 : vector<32x1xf32> to vector<32x128xf32>
    %205 = vector.broadcast %203 : vector<1x128xf32> to vector<32x128xf32>
    %206 = arith.mulf %204, %205 : vector<32x128xf32>
    %207 = arith.addf %201, %206 : vector<32x128xf32>
    %208 = vector.extract_strided_slice %32 {offsets = [0, 29], sizes = [32, 1], strides = [1, 1]} : vector<32x32xf32> to vector<32x1xf32>
    %209 = vector.extract_strided_slice %31 {offsets = [29, 0], sizes = [1, 128], strides = [1, 1]} : vector<32x128xf32> to vector<1x128xf32>
    %210 = vector.broadcast %208 : vector<32x1xf32> to vector<32x128xf32>
    %211 = vector.broadcast %209 : vector<1x128xf32> to vector<32x128xf32>
    %212 = arith.mulf %210, %211 : vector<32x128xf32>
    %213 = arith.addf %207, %212 : vector<32x128xf32>
    %214 = vector.extract_strided_slice %32 {offsets = [0, 30], sizes = [32, 1], strides = [1, 1]} : vector<32x32xf32> to vector<32x1xf32>
    %215 = vector.extract_strided_slice %31 {offsets = [30, 0], sizes = [1, 128], strides = [1, 1]} : vector<32x128xf32> to vector<1x128xf32>
    %216 = vector.broadcast %214 : vector<32x1xf32> to vector<32x128xf32>
    %217 = vector.broadcast %215 : vector<1x128xf32> to vector<32x128xf32>
    %218 = arith.mulf %216, %217 : vector<32x128xf32>
    %219 = arith.addf %213, %218 : vector<32x128xf32>
    %220 = vector.extract_strided_slice %32 {offsets = [0, 31], sizes = [32, 1], strides = [1, 1]} : vector<32x32xf32> to vector<32x1xf32>
    %221 = vector.extract_strided_slice %31 {offsets = [31, 0], sizes = [1, 128], strides = [1, 1]} : vector<32x128xf32> to vector<1x128xf32>
    %222 = vector.broadcast %220 : vector<32x1xf32> to vector<32x128xf32>
    %223 = vector.broadcast %221 : vector<1x128xf32> to vector<32x128xf32>
    %224 = arith.mulf %222, %223 : vector<32x128xf32>
    %225 = arith.addf %219, %224 : vector<32x128xf32>
    %c0_9 = arith.constant 0 : index
    %c0_10 = arith.constant 0 : index
    %226 = vector.load %arg5[%c0_9, %c0_10] : memref<32x1xf32, #tpu.memory_space<vmem>>, vector<32x1xf32>
    %227 = vector.broadcast %226 : vector<32x1xf32> to vector<32x128xf32>
    %228 = arith.addf %225, %227 : vector<32x128xf32>
    %cst_11 = arith.constant 0.000000e+00 : f32
    %229 = vector.broadcast %cst_11 : f32 to vector<32x128xf32>
    %230 = arith.maximumf %228, %229 : vector<32x128xf32>
    %c0_12 = arith.constant 0 : index
    %c0_13 = arith.constant 0 : index
    %231 = vector.load %arg6[%c0_12, %c0_13] : memref<32x1xf32, #tpu.memory_space<vmem>>, vector<32x1xf32>
    %232 = vector.broadcast %231 : vector<32x1xf32> to vector<32x128xf32>
    %233 = arith.mulf %230, %232 : vector<32x128xf32>
    %cst_14 = arith.constant dense<0.000000e+00> : vector<128xf32>
    %234 = vector.multi_reduction <add>, %233, %cst_14 [0] : vector<32x128xf32> to vector<128xf32>
    %235 = vector.shape_cast %234 : vector<128xf32> to vector<1x128xf32>
    %c0_15 = arith.constant 0 : index
    %236 = memref.load %arg7[%c0_15] : memref<1xf32, #tpu.memory_space<smem>>
    %237 = vector.broadcast %236 : f32 to vector<1x128xf32>
    %238 = arith.addf %235, %237 : vector<1x128xf32>
    %c0_16 = arith.constant 0 : index
    %c0_17 = arith.constant 0 : index
    %239 = vector.load %arg8[%c0_16, %c0_17] : memref<1x128xf32, #tpu.memory_space<vmem>>, vector<1x128xf32>
    tpu.vector_store %arg8[%c0_16, %c0_17], %238 {strides = array<i32>} : memref<1x128xf32, #tpu.memory_space<vmem>>, vector<1x128xf32>,
    return
  }
  func.func @transform_0(%arg0: i32) -> (i32, i32) {
    %c0_i32 = arith.constant 0 : i32
    %c0_i32_0 = arith.constant 0 : i32
    return %c0_i32, %arg0 : i32, i32
  }
  func.func @transform_1(%arg0: i32) -> (i32, i32) {
    %c0_i32 = arith.constant 0 : i32
    %c0_i32_0 = arith.constant 0 : i32
    %c0_i32_1 = arith.constant 0 : i32
    return %c0_i32, %c0_i32_0 : i32, i32
  }
  func.func @transform_2(%arg0: i32) -> (i32, i32) {
    %c0_i32 = arith.constant 0 : i32
    %c0_i32_0 = arith.constant 0 : i32
    %c0_i32_1 = arith.constant 0 : i32
    return %c0_i32, %c0_i32_0 : i32, i32
  }
  func.func @transform_3(%arg0: i32) -> (i32, i32) {
    %c0_i32 = arith.constant 0 : i32
    %c0_i32_0 = arith.constant 0 : i32
    %c0_i32_1 = arith.constant 0 : i32
    return %c0_i32, %c0_i32_0 : i32, i32
  }
  func.func @transform_4(%arg0: i32) -> (i32, i32) {
    %c0_i32 = arith.constant 0 : i32
    %c0_i32_0 = arith.constant 0 : i32
    %c0_i32_1 = arith.constant 0 : i32
    return %c0_i32, %c0_i32_0 : i32, i32
  }
  func.func @transform_5(%arg0: i32) -> (i32, i32) {
    %c0_i32 = arith.constant 0 : i32
    %c0_i32_0 = arith.constant 0 : i32
    %c0_i32_1 = arith.constant 0 : i32
    return %c0_i32, %c0_i32_0 : i32, i32
  }
  func.func @transform_6(%arg0: i32) -> i32 {
    %c0_i32 = arith.constant 0 : i32
    %c0_i32_0 = arith.constant 0 : i32
    return %c0_i32 : i32
  }
  func.func @transform_7(%arg0: i32) -> (i32, i32) {
    %c0_i32 = arith.constant 0 : i32
    %c0_i32_0 = arith.constant 0 : i32
    return %c0_i32, %arg0 : i32, i32
  }
}

</mosaic_0001>

<llo_original>
// kernel: tpu_custom_call.1
$region0: #{tpu_custom_call.1}
  #allocation0 [shape = 'u32[]', space=smem, size = 0x4, offset = 0x4, fixed_abs, tag = 'smem constant byte address 0x4 - core index']
  #allocation1 [shape = 'u32[144,128]{1,0:T(1,128)}', space=vmem, size = 0x12000, scoped, tag = 'internal scratch']
  #allocation2 [shape = 'f32[1]{0:T(128)S(6)}', space=smem, size = 0x200, scoped, tag = 'scoped memory for tpu_custom_call.1']
  %s0 = inlined_call_operand.vmem [shape: f32[4,128], index: 0, kind: input, shape index: {}]
  %s1 = inlined_call_operand.vmem [shape: f32[32,4], index: 1, kind: input, shape index: {}]
  %s2 = inlined_call_operand.vmem [shape: f32[32,1], index: 2, kind: input, shape index: {}]
  %s3 = inlined_call_operand.vmem [shape: f32[32,32], index: 3, kind: input, shape index: {}]
  %s4 = inlined_call_operand.vmem [shape: f32[32,1], index: 4, kind: input, shape index: {}]
  %s5 = inlined_call_operand.vmem [shape: f32[32,1], index: 5, kind: input, shape index: {}]
  %s6 = inlined_call_operand.<no memory space> [shape: f32[1], index: 6, kind: input, shape index: {}]
  %s7 = inlined_call_operand.hbm [shape: f32[1,128], index: 7, kind: output, shape index: {}]
  %s8 = sld [smem:[#allocation0]]
  $region38: #{tpu_custom_call.1} parent=0
    _
  %s10 = ssub.s32 1, %s8
  %s11 = scalar_select 0, %s10, %s8
  %12 = sst [smem:[#allocation2]] %s6
  $region1: #{tpu_custom_call.1} parent=0
    #allocation3 [shape = 'u8[512]{0}', space=vmem, size = 0x400, scoped, tag = 'output window, operand 0, single buffered']
    #allocation4 [shape = 's32[1]{0}', space=sflag, size = 0x4, scoped, tag = 'scoped memory for tpu_custom_call.1']
    %13 = vsyncpa [#allocation4], 0
    // Predicated region
    $region2: #{tpu_custom_call.1} parent=1 // pred_check
      _
    $region3: #{tpu_custom_call.1} parent=1 // pred_check_branch
      %15 = sbr.rel (0) target = $region5
    $region4: #{tpu_custom_call.1} parent=1 // pred_region
      _
    $region5: #{tpu_custom_call.1} parent=1 // pred_fallthru
      _
    // Predicated region
    $region6: #{tpu_custom_call.1} parent=1 // pred_check
      _
    $region7: #{tpu_custom_call.1} parent=1 // pred_check_branch
      %17 = sbr.rel (0) target = $region9
    $region8: #{tpu_custom_call.1} parent=1 // pred_region
      _
    $region9: #{tpu_custom_call.1} parent=1 // pred_fallthru
      _
    // Predicated region
    $region10: #{tpu_custom_call.1} parent=1 // pred_check
      _
    $region11: #{tpu_custom_call.1} parent=1 // pred_check_branch
      %19 = sbr.rel (0) target = $region13
    $region12: #{tpu_custom_call.1} parent=1 // pred_region
      _
    $region13: #{tpu_custom_call.1} parent=1 // pred_fallthru
      _
    // Predicated region
    $region14: #{tpu_custom_call.1} parent=1 // pred_check
      _
    $region15: #{tpu_custom_call.1} parent=1 // pred_check_branch
      %21 = sbr.rel (0) target = $region17
    $region16: #{tpu_custom_call.1} parent=1 // pred_region
      _
    $region17: #{tpu_custom_call.1} parent=1 // pred_fallthru
      _
    // Predicated region
    $region18: #{tpu_custom_call.1} parent=1 // pred_check
      _
    $region19: #{tpu_custom_call.1} parent=1 // pred_check_branch
      %23 = sbr.rel (0) target = $region21
    $region20: #{tpu_custom_call.1} parent=1 // pred_region
      _
    $region21: #{tpu_custom_call.1} parent=1 // pred_fallthru
      _
    // Predicated region
    $region22: #{tpu_custom_call.1} parent=1 // pred_check
      _
    $region23: #{tpu_custom_call.1} parent=1 // pred_check_branch
      %25 = sbr.rel (0) target = $region25
    $region24: #{tpu_custom_call.1} parent=1 // pred_region
      _
    $region25: #{tpu_custom_call.1} parent=1 // pred_fallthru
      _
    // Predicated region
    $region26: #{tpu_custom_call.1} parent=1 // pred_check
      _
    $region27: #{tpu_custom_call.1} parent=1 // pred_check_branch
      %27 = sbr.rel (0) target = $region29
    $region28: #{tpu_custom_call.1} parent=1 // pred_region
      _
    $region29: #{tpu_custom_call.1} parent=1 // pred_fallthru
      _
    %v28 = vld [vmem:[%s0] sm:$0xf]
    %v29 = vld [vmem:[%s1] sm:$0xff]
    %v30 = vld [vmem:[%s1 + $0x8] sm:$0xff]
    %v31 = vld [vmem:[%s1 + $0x10] sm:$0xff]
    %v32 = vld [vmem:[%s1 + $0x18] sm:$0xff]
    %34 = vset.pattern.permute.xlu0 0
    %35 = vperm.xlu0 %34, %v29
    %v36 = vpop.permute.xlu0 %35
    %39 = vset.pattern.permute.xlu0 0
    %40 = vperm.xlu0 %39, %v30
    %v41 = vpop.permute.xlu0 %40
    %44 = vset.pattern.permute.xlu0 0
    %45 = vperm.xlu0 %44, %v31
    %v46 = vpop.permute.xlu0 %45
    %49 = vset.pattern.permute.xlu0 0
    %50 = vperm.xlu0 %49, %v32
    %v51 = vpop.permute.xlu0 %50
    %v53 = vlaneseq
    %v54 = vshrl.u32 %v53, 7
    %v55 = vsub.s32 0, %v54
    %v56 = vrot.slane %v28, %v55
    %v57 = vmul.f32 %v36, %v56
    %v58 = vmul.f32 %v41, %v56
    %v59 = vmul.f32 %v46, %v56
    %v60 = vmul.f32 %v51, %v56
    %v61 = vadd.f32 %v57, 0.0
    %v62 = vadd.f32 %v58, 0.0
    %v63 = vadd.f32 %v59, 0.0
    %v64 = vadd.f32 %v60, 0.0
    %65 = vset.pattern.permute.xlu0 1
    %66 = vperm.xlu0 %65, %v29
    %v67 = vpop.permute.xlu0 %66
    %69 = vset.pattern.permute.xlu0 1
    %70 = vperm.xlu0 %69, %v30
    %v71 = vpop.permute.xlu0 %70
    %73 = vset.pattern.permute.xlu0 1
    %74 = vperm.xlu0 %73, %v31
    %v75 = vpop.permute.xlu0 %74
    %77 = vset.pattern.permute.xlu0 1
    %78 = vperm.xlu0 %77, %v32
    %v79 = vpop.permute.xlu0 %78
    %v81 = vlaneseq
    %v82 = vshrl.u32 %v81, 7
    %v83 = vsub.s32 1, %v82
    %v84 = vrot.slane %v28, %v83
    %v85 = vmul.f32 %v67, %v84
    %v86 = vmul.f32 %v71, %v84
    %v87 = vmul.f32 %v75, %v84
    %v88 = vmul.f32 %v79, %v84
    %v89 = vadd.f32 %v61, %v85
    %v90 = vadd.f32 %v62, %v86
    %v91 = vadd.f32 %v63, %v87
    %v92 = vadd.f32 %v64, %v88
    %93 = vset.pattern.permute.xlu0 2
    %94 = vperm.xlu0 %93, %v29
    %v95 = vpop.permute.xlu0 %94
    %97 = vset.pattern.permute.xlu0 2
    %98 = vperm.xlu0 %97, %v30
    %v99 = vpop.permute.xlu0 %98
    %101 = vset.pattern.permute.xlu0 2
    %102 = vperm.xlu0 %101, %v31
    %v103 = vpop.permute.xlu0 %102
    %105 = vset.pattern.permute.xlu0 2
    %106 = vperm.xlu0 %105, %v32
    %v107 = vpop.permute.xlu0 %106
    %v109 = vlaneseq
    %v110 = vshrl.u32 %v109, 7
    %v111 = vsub.s32 2, %v110
    %v112 = vrot.slane %v28, %v111
    %v113 = vmul.f32 %v95, %v112
    %v114 = vmul.f32 %v99, %v112
    %v115 = vmul.f32 %v103, %v112
    %v116 = vmul.f32 %v107, %v112
    %v117 = vadd.f32 %v89, %v113
    %v118 = vadd.f32 %v90, %v114
    %v119 = vadd.f32 %v91, %v115
    %v120 = vadd.f32 %v92, %v116
    %121 = vset.pattern.permute.xlu0 3
    %122 = vperm.xlu0 %121, %v29
    %v123 = vpop.permute.xlu0 %122
    %125 = vset.pattern.permute.xlu0 3
    %126 = vperm.xlu0 %125, %v30
    %v127 = vpop.permute.xlu0 %126
    %129 = vset.pattern.permute.xlu0 3
    %130 = vperm.xlu0 %129, %v31
    %v131 = vpop.permute.xlu0 %130
    %133 = vset.pattern.permute.xlu0 3
    %134 = vperm.xlu0 %133, %v32
    %v135 = vpop.permute.xlu0 %134
    %v137 = vlaneseq
    %v138 = vshrl.u32 %v137, 7
    %v139 = vsub.s32 3, %v138
    %v140 = vrot.slane %v28, %v139
    %v141 = vmul.f32 %v123, %v140
    %v142 = vmul.f32 %v127, %v140
    %v143 = vmul.f32 %v131, %v140
    %v144 = vmul.f32 %v135, %v140
    %v145 = vadd.f32 %v117, %v141
    %v146 = vadd.f32 %v118, %v142
    %v147 = vadd.f32 %v119, %v143
    %v148 = vadd.f32 %v120, %v144
    %v149 = vld [vmem:[%s2] sm:$0xff]
    %v150 = vld [vmem:[%s2 + $0x8] sm:$0xff]
    %v151 = vld [vmem:[%s2 + $0x10] sm:$0xff]
    %v152 = vld [vmem:[%s2 + $0x18] sm:$0xff]
    %154 = vset.pattern.permute.xlu0 0
    %155 = vperm.xlu0 %154, %v149
    %v156 = vpop.permute.xlu0 %155
    %159 = vset.pattern.permute.xlu0 0
    %160 = vperm.xlu0 %159, %v150
    %v161 = vpop.permute.xlu0 %160
    %164 = vset.pattern.permute.xlu0 0
    %165 = vperm.xlu0 %164, %v151
    %v166 = vpop.permute.xlu0 %165
    %169 = vset.pattern.permute.xlu0 0
    %170 = vperm.xlu0 %169, %v152
    %v171 = vpop.permute.xlu0 %170
    %v173 = vadd.f32 %v145, %v156
    %v174 = vadd.f32 %v146, %v161
    %v175 = vadd.f32 %v147, %v166
    %v176 = vadd.f32 %v148, %v171
    %v177 = vmax.f32 %v173, 0.0
    %v178 = vmax.f32 %v174, 0.0
    %v179 = vmax.f32 %v175, 0.0
    %v180 = vmax.f32 %v176, 0.0
    %v181 = vld [vmem:[%s3] sm:$0xff]
    %v182 = vld [vmem:[%s3 + $0x8] sm:$0xff]
    %v183 = vld [vmem:[%s3 + $0x10] sm:$0xff]
    %v184 = vld [vmem:[%s3 + $0x18] sm:$0xff]
    %186 = vset.pattern.permute.xlu0 0
    %187 = vperm.xlu0 %186, %v181
    %v188 = vpop.permute.xlu0 %187
    %191 = vset.pattern.permute.xlu0 0
    %192 = vperm.xlu0 %191, %v182
    %v193 = vpop.permute.xlu0 %192
    %196 = vset.pattern.permute.xlu0 0
    %197 = vperm.xlu0 %196, %v183
    %v198 = vpop.permute.xlu0 %197
    %201 = vset.pattern.permute.xlu0 0
    %202 = vperm.xlu0 %201, %v184
    %v203 = vpop.permute.xlu0 %202
    %v205 = vlaneseq
    %v206 = vshrl.u32 %v205, 7
    %v207 = vsub.s32 0, %v206
    %v208 = vrot.slane %v177, %v207
    %v209 = vmul.f32 %v188, %v208
    %v210 = vmul.f32 %v193, %v208
    %v211 = vmul.f32 %v198, %v208
    %v212 = vmul.f32 %v203, %v208
    %v213 = vadd.f32 %v209, 0.0
    %v214 = vadd.f32 %v210, 0.0
    %v215 = vadd.f32 %v211, 0.0
    %v216 = vadd.f32 %v212, 0.0
    %217 = vset.pattern.permute.xlu0 1
    %218 = vperm.xlu0 %217, %v181
    %v219 = vpop.permute.xlu0 %218
    %221 = vset.pattern.permute.xlu0 1
    %222 = vperm.xlu0 %221, %v182
    %v223 = vpop.permute.xlu0 %222
    %225 = vset.pattern.permute.xlu0 1
    %226 = vperm.xlu0 %225, %v183
    %v227 = vpop.permute.xlu0 %226
    %229 = vset.pattern.permute.xlu0 1
    %230 = vperm.xlu0 %229, %v184
    %v231 = vpop.permute.xlu0 %230
    %v233 = vlaneseq
    %v234 = vshrl.u32 %v233, 7
    %v235 = vsub.s32 1, %v234
    %v236 = vrot.slane %v177, %v235
    %v237 = vmul.f32 %v219, %v236
    %v238 = vmul.f32 %v223, %v236
    %v239 = vmul.f32 %v227, %v236
    %v240 = vmul.f32 %v231, %v236
    %v241 = vadd.f32 %v213, %v237
    %v242 = vadd.f32 %v214, %v238
    %v243 = vadd.f32 %v215, %v239
    %v244 = vadd.f32 %v216, %v240
    %245 = vset.pattern.permute.xlu0 2
    %246 = vperm.xlu0 %245, %v181
    %v247 = vpop.permute.xlu0 %246
    %249 = vset.pattern.permute.xlu0 2
    %250 = vperm.xlu0 %249, %v182
    %v251 = vpop.permute.xlu0 %250
    %253 = vset.pattern.permute.xlu0 2
    %254 = vperm.xlu0 %253, %v183
    %v255 = vpop.permute.xlu0 %254
    %257 = vset.pattern.permute.xlu0 2
    %258 = vperm.xlu0 %257, %v184
    %v259 = vpop.permute.xlu0 %258
    %v261 = vlaneseq
    %v262 = vshrl.u32 %v261, 7
    %v263 = vsub.s32 2, %v262
    %v264 = vrot.slane %v177, %v263
    %v265 = vmul.f32 %v247, %v264
    %v266 = vmul.f32 %v251, %v264
    %v267 = vmul.f32 %v255, %v264
    %v268 = vmul.f32 %v259, %v264
    %v269 = vadd.f32 %v241, %v265
    %v270 = vadd.f32 %v242, %v266
    %v271 = vadd.f32 %v243, %v267
    %v272 = vadd.f32 %v244, %v268
    %273 = vset.pattern.permute.xlu0 3
    %274 = vperm.xlu0 %273, %v181
    %v275 = vpop.permute.xlu0 %274
    %277 = vset.pattern.permute.xlu0 3
    %278 = vperm.xlu0 %277, %v182
    %v279 = vpop.permute.xlu0 %278
    %281 = vset.pattern.permute.xlu0 3
    %282 = vperm.xlu0 %281, %v183
    %v283 = vpop.permute.xlu0 %282
    %285 = vset.pattern.permute.xlu0 3
    %286 = vperm.xlu0 %285, %v184
    %v287 = vpop.permute.xlu0 %286
    %v289 = vlaneseq
    %v290 = vshrl.u32 %v289, 7
    %v291 = vsub.s32 3, %v290
    %v292 = vrot.slane %v177, %v291
    %v293 = vmul.f32 %v275, %v292
    %v294 = vmul.f32 %v279, %v292
    %v295 = vmul.f32 %v283, %v292
    %v296 = vmul.f32 %v287, %v292
    %v297 = vadd.f32 %v269, %v293
    %v298 = vadd.f32 %v270, %v294
    %v299 = vadd.f32 %v271, %v295
    %v300 = vadd.f32 %v272, %v296
    %301 = vset.pattern.permute.xlu0 4
    %302 = vperm.xlu0 %301, %v181
    %v303 = vpop.permute.xlu0 %302
    %305 = vset.pattern.permute.xlu0 4
    %306 = vperm.xlu0 %305, %v182
    %v307 = vpop.permute.xlu0 %306
    %309 = vset.pattern.permute.xlu0 4
    %310 = vperm.xlu0 %309, %v183
    %v311 = vpop.permute.xlu0 %310
    %313 = vset.pattern.permute.xlu0 4
    %314 = vperm.xlu0 %313, %v184
    %v315 = vpop.permute.xlu0 %314
    %v317 = vlaneseq
    %v318 = vshrl.u32 %v317, 7
    %v319 = vsub.s32 4, %v318
    %v320 = vrot.slane %v177, %v319
    %v321 = vmul.f32 %v303, %v320
    %v322 = vmul.f32 %v307, %v320
    %v323 = vmul.f32 %v311, %v320
    %v324 = vmul.f32 %v315, %v320
    %v325 = vadd.f32 %v297, %v321
    %v326 = vadd.f32 %v298, %v322
    %v327 = vadd.f32 %v299, %v323
    %v328 = vadd.f32 %v300, %v324
    %329 = vset.pattern.permute.xlu0 5
    %330 = vperm.xlu0 %329, %v181
    %v331 = vpop.permute.xlu0 %330
    %333 = vset.pattern.permute.xlu0 5
    %334 = vperm.xlu0 %333, %v182
    %v335 = vpop.permute.xlu0 %334
    %337 = vset.pattern.permute.xlu0 5
    %338 = vperm.xlu0 %337, %v183
    %v339 = vpop.permute.xlu0 %338
    %341 = vset.pattern.permute.xlu0 5
    %342 = vperm.xlu0 %341, %v184
    %v343 = vpop.permute.xlu0 %342
    %v345 = vlaneseq
    %v346 = vshrl.u32 %v345, 7
    %v347 = vsub.s32 5, %v346
    %v348 = vrot.slane %v177, %v347
    %v349 = vmul.f32 %v331, %v348
    %v350 = vmul.f32 %v335, %v348
    %v351 = vmul.f32 %v339, %v348
    %v352 = vmul.f32 %v343, %v348
    %v353 = vadd.f32 %v325, %v349
    %v354 = vadd.f32 %v326, %v350
    %v355 = vadd.f32 %v327, %v351
    %v356 = vadd.f32 %v328, %v352
    %357 = vset.pattern.permute.xlu0 6
    %358 = vperm.xlu0 %357, %v181
    %v359 = vpop.permute.xlu0 %358
    %361 = vset.pattern.permute.xlu0 6
    %362 = vperm.xlu0 %361, %v182
    %v363 = vpop.permute.xlu0 %362
    %365 = vset.pattern.permute.xlu0 6
    %366 = vperm.xlu0 %365, %v183
    %v367 = vpop.permute.xlu0 %366
    %369 = vset.pattern.permute.xlu0 6
    %370 = vperm.xlu0 %369, %v184
    %v371 = vpop.permute.xlu0 %370
    %v373 = vlaneseq
    %v374 = vshrl.u32 %v373, 7
    %v375 = vsub.s32 6, %v374
    %v376 = vrot.slane %v177, %v375
    %v377 = vmul.f32 %v359, %v376
    %v378 = vmul.f32 %v363, %v376
    %v379 = vmul.f32 %v367, %v376
    %v380 = vmul.f32 %v371, %v376
    %v381 = vadd.f32 %v353, %v377
    %v382 = vadd.f32 %v354, %v378
    %v383 = vadd.f32 %v355, %v379
    %v384 = vadd.f32 %v356, %v380
    %385 = vset.pattern.permute.xlu0 7
    %386 = vperm.xlu0 %385, %v181
    %v387 = vpop.permute.xlu0 %386
    %389 = vset.pattern.permute.xlu0 7
    %390 = vperm.xlu0 %389, %v182
    %v391 = vpop.permute.xlu0 %390
    %393 = vset.pattern.permute.xlu0 7
    %394 = vperm.xlu0 %393, %v183
    %v395 = vpop.permute.xlu0 %394
    %397 = vset.pattern.permute.xlu0 7
    %398 = vperm.xlu0 %397, %v184
    %v399 = vpop.permute.xlu0 %398
    %v401 = vlaneseq
    %v402 = vshrl.u32 %v401, 7
    %v403 = vsub.s32 7, %v402
    %v404 = vrot.slane %v177, %v403
    %v405 = vmul.f32 %v387, %v404
    %v406 = vmul.f32 %v391, %v404
    %v407 = vmul.f32 %v395, %v404
    %v408 = vmul.f32 %v399, %v404
    %v409 = vadd.f32 %v381, %v405
    %v410 = vadd.f32 %v382, %v406
    %v411 = vadd.f32 %v383, %v407
    %v412 = vadd.f32 %v384, %v408
    %413 = vset.pattern.permute.xlu0 8
    %414 = vperm.xlu0 %413, %v181
    %v415 = vpop.permute.xlu0 %414
    %417 = vset.pattern.permute.xlu0 8
    %418 = vperm.xlu0 %417, %v182
    %v419 = vpop.permute.xlu0 %418
    %421 = vset.pattern.permute.xlu0 8
    %422 = vperm.xlu0 %421, %v183
    %v423 = vpop.permute.xlu0 %422
    %425 = vset.pattern.permute.xlu0 8
    %426 = vperm.xlu0 %425, %v184
    %v427 = vpop.permute.xlu0 %426
    %v429 = vlaneseq
    %v430 = vshrl.u32 %v429, 7
    %v431 = vsub.s32 0, %v430
    %v432 = vrot.slane %v178, %v431
    %v433 = vmul.f32 %v415, %v432
    %v434 = vmul.f32 %v419, %v432
    %v435 = vmul.f32 %v423, %v432
    %v436 = vmul.f32 %v427, %v432
    %v437 = vadd.f32 %v409, %v433
    %v438 = vadd.f32 %v410, %v434
    %v439 = vadd.f32 %v411, %v435
    %v440 = vadd.f32 %v412, %v436
    %441 = vset.pattern.permute.xlu0 9
    %442 = vperm.xlu0 %441, %v181
    %v443 = vpop.permute.xlu0 %442
    %445 = vset.pattern.permute.xlu0 9
    %446 = vperm.xlu0 %445, %v182
    %v447 = vpop.permute.xlu0 %446
    %449 = vset.pattern.permute.xlu0 9
    %450 = vperm.xlu0 %449, %v183
    %v451 = vpop.permute.xlu0 %450
    %453 = vset.pattern.permute.xlu0 9
    %454 = vperm.xlu0 %453, %v184
    %v455 = vpop.permute.xlu0 %454
    %v457 = vlaneseq
    %v458 = vshrl.u32 %v457, 7
    %v459 = vsub.s32 1, %v458
    %v460 = vrot.slane %v178, %v459
    %v461 = vmul.f32 %v443, %v460
    %v462 = vmul.f32 %v447, %v460
    %v463 = vmul.f32 %v451, %v460
    %v464 = vmul.f32 %v455, %v460
    %v465 = vadd.f32 %v437, %v461
    %v466 = vadd.f32 %v438, %v462
    %v467 = vadd.f32 %v439, %v463
    %v468 = vadd.f32 %v440, %v464
    %469 = vset.pattern.permute.xlu0 10
    %470 = vperm.xlu0 %469, %v181
    %v471 = vpop.permute.xlu0 %470
    %473 = vset.pattern.permute.xlu0 10
    %474 = vperm.xlu0 %473, %v182
    %v475 = vpop.permute.xlu0 %474
    %477 = vset.pattern.permute.xlu0 10
    %478 = vperm.xlu0 %477, %v183
    %v479 = vpop.permute.xlu0 %478
    %481 = vset.pattern.permute.xlu0 10
    %482 = vperm.xlu0 %481, %v184
    %v483 = vpop.permute.xlu0 %482
    %v485 = vlaneseq
    %v486 = vshrl.u32 %v485, 7
    %v487 = vsub.s32 2, %v486
    %v488 = vrot.slane %v178, %v487
    %v489 = vmul.f32 %v471, %v488
    %v490 = vmul.f32 %v475, %v488
    %v491 = vmul.f32 %v479, %v488
    %v492 = vmul.f32 %v483, %v488
    %v493 = vadd.f32 %v465, %v489
    %v494 = vadd.f32 %v466, %v490
    %v495 = vadd.f32 %v467, %v491
    %v496 = vadd.f32 %v468, %v492
    %497 = vset.pattern.permute.xlu0 11
    %498 = vperm.xlu0 %497, %v181
    %v499 = vpop.permute.xlu0 %498
    %501 = vset.pattern.permute.xlu0 11
    %502 = vperm.xlu0 %501, %v182
    %v503 = vpop.permute.xlu0 %502
    %505 = vset.pattern.permute.xlu0 11
    %506 = vperm.xlu0 %505, %v183
    %v507 = vpop.permute.xlu0 %506
    %509 = vset.pattern.permute.xlu0 11
    %510 = vperm.xlu0 %509, %v184
    %v511 = vpop.permute.xlu0 %510
    %v513 = vlaneseq
    %v514 = vshrl.u32 %v513, 7
    %v515 = vsub.s32 3, %v514
    %v516 = vrot.slane %v178, %v515
    %v517 = vmul.f32 %v499, %v516
    %v518 = vmul.f32 %v503, %v516
    %v519 = vmul.f32 %v507, %v516
    %v520 = vmul.f32 %v511, %v516
    %v521 = vadd.f32 %v493, %v517
    %v522 = vadd.f32 %v494, %v518
    %v523 = vadd.f32 %v495, %v519
    %v524 = vadd.f32 %v496, %v520
    %525 = vset.pattern.permute.xlu0 12
    %526 = vperm.xlu0 %525, %v181
    %v527 = vpop.permute.xlu0 %526
    %529 = vset.pattern.permute.xlu0 12
    %530 = vperm.xlu0 %529, %v182
    %v531 = vpop.permute.xlu0 %530
    %533 = vset.pattern.permute.xlu0 12
    %534 = vperm.xlu0 %533, %v183
    %v535 = vpop.permute.xlu0 %534
    %537 = vset.pattern.permute.xlu0 12
    %538 = vperm.xlu0 %537, %v184
    %v539 = vpop.permute.xlu0 %538
    %v541 = vlaneseq
    %v542 = vshrl.u32 %v541, 7
    %v543 = vsub.s32 4, %v542
    %v544 = vrot.slane %v178, %v543
    %v545 = vmul.f32 %v527, %v544
    %v546 = vmul.f32 %v531, %v544
    %v547 = vmul.f32 %v535, %v544
    %v548 = vmul.f32 %v539, %v544
    %v549 = vadd.f32 %v521, %v545
    %v550 = vadd.f32 %v522, %v546
    %v551 = vadd.f32 %v523, %v547
    %v552 = vadd.f32 %v524, %v548
    %553 = vset.pattern.permute.xlu0 13
    %554 = vperm.xlu0 %553, %v181
    %v555 = vpop.permute.xlu0 %554
    %557 = vset.pattern.permute.xlu0 13
    %558 = vperm.xlu0 %557, %v182
    %v559 = vpop.permute.xlu0 %558
    %561 = vset.pattern.permute.xlu0 13
    %562 = vperm.xlu0 %561, %v183
    %v563 = vpop.permute.xlu0 %562
    %565 = vset.pattern.permute.xlu0 13
    %566 = vperm.xlu0 %565, %v184
    %v567 = vpop.permute.xlu0 %566
    %v569 = vlaneseq
    %v570 = vshrl.u32 %v569, 7
    %v571 = vsub.s32 5, %v570
    %v572 = vrot.slane %v178, %v571
    %v573 = vmul.f32 %v555, %v572
    %v574 = vmul.f32 %v559, %v572
    %v575 = vmul.f32 %v563, %v572
    %v576 = vmul.f32 %v567, %v572
    %v577 = vadd.f32 %v549, %v573
    %v578 = vadd.f32 %v550, %v574
    %v579 = vadd.f32 %v551, %v575
    %v580 = vadd.f32 %v552, %v576
    %581 = vset.pattern.permute.xlu0 14
    %582 = vperm.xlu0 %581, %v181
    %v583 = vpop.permute.xlu0 %582
    %585 = vset.pattern.permute.xlu0 14
    %586 = vperm.xlu0 %585, %v182
    %v587 = vpop.permute.xlu0 %586
    %589 = vset.pattern.permute.xlu0 14
    %590 = vperm.xlu0 %589, %v183
    %v591 = vpop.permute.xlu0 %590
    %593 = vset.pattern.permute.xlu0 14
    %594 = vperm.xlu0 %593, %v184
    %v595 = vpop.permute.xlu0 %594
    %v597 = vlaneseq
    %v598 = vshrl.u32 %v597, 7
    %v599 = vsub.s32 6, %v598
    %v600 = vrot.slane %v178, %v599
    %v601 = vmul.f32 %v583, %v600
    %v602 = vmul.f32 %v587, %v600
    %v603 = vmul.f32 %v591, %v600
    %v604 = vmul.f32 %v595, %v600
    %v605 = vadd.f32 %v577, %v601
    %v606 = vadd.f32 %v578, %v602
    %v607 = vadd.f32 %v579, %v603
    %v608 = vadd.f32 %v580, %v604
    %609 = vset.pattern.permute.xlu0 15
    %610 = vperm.xlu0 %609, %v181
    %v611 = vpop.permute.xlu0 %610
    %613 = vset.pattern.permute.xlu0 15
    %614 = vperm.xlu0 %613, %v182
    %v615 = vpop.permute.xlu0 %614
    %617 = vset.pattern.permute.xlu0 15
    %618 = vperm.xlu0 %617, %v183
    %v619 = vpop.permute.xlu0 %618
    %621 = vset.pattern.permute.xlu0 15
    %622 = vperm.xlu0 %621, %v184
    %v623 = vpop.permute.xlu0 %622
    %v625 = vlaneseq
    %v626 = vshrl.u32 %v625, 7
    %v627 = vsub.s32 7, %v626
    %v628 = vrot.slane %v178, %v627
    %v629 = vmul.f32 %v611, %v628
    %v630 = vmul.f32 %v615, %v628
    %v631 = vmul.f32 %v619, %v628
    %v632 = vmul.f32 %v623, %v628
    %v633 = vadd.f32 %v605, %v629
    %v634 = vadd.f32 %v606, %v630
    %v635 = vadd.f32 %v607, %v631
    %v636 = vadd.f32 %v608, %v632
    %637 = vset.pattern.permute.xlu0 16
    %638 = vperm.xlu0 %637, %v181
    %v639 = vpop.permute.xlu0 %638
    %641 = vset.pattern.permute.xlu0 16
    %642 = vperm.xlu0 %641, %v182
    %v643 = vpop.permute.xlu0 %642
    %645 = vset.pattern.permute.xlu0 16
    %646 = vperm.xlu0 %645, %v183
    %v647 = vpop.permute.xlu0 %646
    %649 = vset.pattern.permute.xlu0 16
    %650 = vperm.xlu0 %649, %v184
    %v651 = vpop.permute.xlu0 %650
    %v653 = vlaneseq
    %v654 = vshrl.u32 %v653, 7
    %v655 = vsub.s32 0, %v654
    %v656 = vrot.slane %v179, %v655
    %v657 = vmul.f32 %v639, %v656
    %v658 = vmul.f32 %v643, %v656
    %v659 = vmul.f32 %v647, %v656
    %v660 = vmul.f32 %v651, %v656
    %v661 = vadd.f32 %v633, %v657
    %v662 = vadd.f32 %v634, %v658
    %v663 = vadd.f32 %v635, %v659
    %v664 = vadd.f32 %v636, %v660
    %665 = vset.pattern.permute.xlu0 17
    %666 = vperm.xlu0 %665, %v181
    %v667 = vpop.permute.xlu0 %666
    %669 = vset.pattern.permute.xlu0 17
    %670 = vperm.xlu0 %669, %v182
    %v671 = vpop.permute.xlu0 %670
    %673 = vset.pattern.permute.xlu0 17
    %674 = vperm.xlu0 %673, %v183
    %v675 = vpop.permute.xlu0 %674
    %677 = vset.pattern.permute.xlu0 17
    %678 = vperm.xlu0 %677, %v184
    %v679 = vpop.permute.xlu0 %678
    %v681 = vlaneseq
    %v682 = vshrl.u32 %v681, 7
    %v683 = vsub.s32 1, %v682
    %v684 = vrot.slane %v179, %v683
    %v685 = vmul.f32 %v667, %v684
    %v686 = vmul.f32 %v671, %v684
    %v687 = vmul.f32 %v675, %v684
    %v688 = vmul.f32 %v679, %v684
    %v689 = vadd.f32 %v661, %v685
    %v690 = vadd.f32 %v662, %v686
    %v691 = vadd.f32 %v663, %v687
    %v692 = vadd.f32 %v664, %v688
    %693 = vset.pattern.permute.xlu0 18
    %694 = vperm.xlu0 %693, %v181
    %v695 = vpop.permute.xlu0 %694
    %697 = vset.pattern.permute.xlu0 18
    %698 = vperm.xlu0 %697, %v182
    %v699 = vpop.permute.xlu0 %698
    %701 = vset.pattern.permute.xlu0 18
    %702 = vperm.xlu0 %701, %v183
    %v703 = vpop.permute.xlu0 %702
    %705 = vset.pattern.permute.xlu0 18
    %706 = vperm.xlu0 %705, %v184
    %v707 = vpop.permute.xlu0 %706
    %v709 = vlaneseq
    %v710 = vshrl.u32 %v709, 7
    %v711 = vsub.s32 2, %v710
    %v712 = vrot.slane %v179, %v711
    %v713 = vmul.f32 %v695, %v712
    %v714 = vmul.f32 %v699, %v712
    %v715 = vmul.f32 %v703, %v712
    %v716 = vmul.f32 %v707, %v712
    %v717 = vadd.f32 %v689, %v713
    %v718 = vadd.f32 %v690, %v714
    %v719 = vadd.f32 %v691, %v715
    %v720 = vadd.f32 %v692, %v716
    %721 = vset.pattern.permute.xlu0 19
    %722 = vperm.xlu0 %721, %v181
    %v723 = vpop.permute.xlu0 %722
    %725 = vset.pattern.permute.xlu0 19
    %726 = vperm.xlu0 %725, %v182
    %v727 = vpop.permute.xlu0 %726
    %729 = vset.pattern.permute.xlu0 19
    %730 = vperm.xlu0 %729, %v183
    %v731 = vpop.permute.xlu0 %730
    %733 = vset.pattern.permute.xlu0 19
    %734 = vperm.xlu0 %733, %v184
    %v735 = vpop.permute.xlu0 %734
    %v737 = vlaneseq
    %v738 = vshrl.u32 %v737, 7
    %v739 = vsub.s32 3, %v738
    %v740 = vrot.slane %v179, %v739
    %v741 = vmul.f32 %v723, %v740
    %v742 = vmul.f32 %v727, %v740
    %v743 = vmul.f32 %v731, %v740
    %v744 = vmul.f32 %v735, %v740
    %v745 = vadd.f32 %v717, %v741
    %v746 = vadd.f32 %v718, %v742
    %v747 = vadd.f32 %v719, %v743
    %v748 = vadd.f32 %v720, %v744
    %749 = vset.pattern.permute.xlu0 20
    %750 = vperm.xlu0 %749, %v181
    %v751 = vpop.permute.xlu0 %750
    %753 = vset.pattern.permute.xlu0 20
    %754 = vperm.xlu0 %753, %v182
    %v755 = vpop.permute.xlu0 %754
    %757 = vset.pattern.permute.xlu0 20
    %758 = vperm.xlu0 %757, %v183
    %v759 = vpop.permute.xlu0 %758
    %761 = vset.pattern.permute.xlu0 20
    %762 = vperm.xlu0 %761, %v184
    %v763 = vpop.permute.xlu0 %762
    %v765 = vlaneseq
    %v766 = vshrl.u32 %v765, 7
    %v767 = vsub.s32 4, %v766
    %v768 = vrot.slane %v179, %v767
    %v769 = vmul.f32 %v751, %v768
    %v770 = vmul.f32 %v755, %v768
    %v771 = vmul.f32 %v759, %v768
    %v772 = vmul.f32 %v763, %v768
    %v773 = vadd.f32 %v745, %v769
    %v774 = vadd.f32 %v746, %v770
    %v775 = vadd.f32 %v747, %v771
    %v776 = vadd.f32 %v748, %v772
    %777 = vset.pattern.permute.xlu0 21
    %778 = vperm.xlu0 %777, %v181
    %v779 = vpop.permute.xlu0 %778
    %781 = vset.pattern.permute.xlu0 21
    %782 = vperm.xlu0 %781, %v182
    %v783 = vpop.permute.xlu0 %782
    %785 = vset.pattern.permute.xlu0 21
    %786 = vperm.xlu0 %785, %v183
    %v787 = vpop.permute.xlu0 %786
    %789 = vset.pattern.permute.xlu0 21
    %790 = vperm.xlu0 %789, %v184
    %v791 = vpop.permute.xlu0 %790
    %v793 = vlaneseq
    %v794 = vshrl.u32 %v793, 7
    %v795 = vsub.s32 5, %v794
    %v796 = vrot.slane %v179, %v795
    %v797 = vmul.f32 %v779, %v796
    %v798 = vmul.f32 %v783, %v796
    %v799 = vmul.f32 %v787, %v796
    %v800 = vmul.f32 %v791, %v796
    %v801 = vadd.f32 %v773, %v797
    %v802 = vadd.f32 %v774, %v798
    %v803 = vadd.f32 %v775, %v799
    %v804 = vadd.f32 %v776, %v800
    %805 = vset.pattern.permute.xlu0 22
    %806 = vperm.xlu0 %805, %v181
    %v807 = vpop.permute.xlu0 %806
    %809 = vset.pattern.permute.xlu0 22
    %810 = vperm.xlu0 %809, %v182
    %v811 = vpop.permute.xlu0 %810
    %813 = vset.pattern.permute.xlu0 22
    %814 = vperm.xlu0 %813, %v183
    %v815 = vpop.permute.xlu0 %814
    %817 = vset.pattern.permute.xlu0 22
    %818 = vperm.xlu0 %817, %v184
    %v819 = vpop.permute.xlu0 %818
    %v821 = vlaneseq
    %v822 = vshrl.u32 %v821, 7
    %v823 = vsub.s32 6, %v822
    %v824 = vrot.slane %v179, %v823
    %v825 = vmul.f32 %v807, %v824
    %v826 = vmul.f32 %v811, %v824
    %v827 = vmul.f32 %v815, %v824
    %v828 = vmul.f32 %v819, %v824
    %v829 = vadd.f32 %v801, %v825
    %v830 = vadd.f32 %v802, %v826
    %v831 = vadd.f32 %v803, %v827
    %v832 = vadd.f32 %v804, %v828
    %833 = vset.pattern.permute.xlu0 23
    %834 = vperm.xlu0 %833, %v181
    %v835 = vpop.permute.xlu0 %834
    %837 = vset.pattern.permute.xlu0 23
    %838 = vperm.xlu0 %837, %v182
    %v839 = vpop.permute.xlu0 %838
    %841 = vset.pattern.permute.xlu0 23
    %842 = vperm.xlu0 %841, %v183
    %v843 = vpop.permute.xlu0 %842
    %845 = vset.pattern.permute.xlu0 23
    %846 = vperm.xlu0 %845, %v184
    %v847 = vpop.permute.xlu0 %846
    %v849 = vlaneseq
    %v850 = vshrl.u32 %v849, 7
    %v851 = vsub.s32 7, %v850
    %v852 = vrot.slane %v179, %v851
    %v853 = vmul.f32 %v835, %v852
    %v854 = vmul.f32 %v839, %v852
    %v855 = vmul.f32 %v843, %v852
    %v856 = vmul.f32 %v847, %v852
    %v857 = vadd.f32 %v829, %v853
    %v858 = vadd.f32 %v830, %v854
    %v859 = vadd.f32 %v831, %v855
    %v860 = vadd.f32 %v832, %v856
    %861 = vset.pattern.permute.xlu0 24
    %862 = vperm.xlu0 %861, %v181
    %v863 = vpop.permute.xlu0 %862
    %865 = vset.pattern.permute.xlu0 24
    %866 = vperm.xlu0 %865, %v182
    %v867 = vpop.permute.xlu0 %866
    %869 = vset.pattern.permute.xlu0 24
    %870 = vperm.xlu0 %869, %v183
    %v871 = vpop.permute.xlu0 %870
    %873 = vset.pattern.permute.xlu0 24
    %874 = vperm.xlu0 %873, %v184
    %v875 = vpop.permute.xlu0 %874
    %v877 = vlaneseq
    %v878 = vshrl.u32 %v877, 7
    %v879 = vsub.s32 0, %v878
    %v880 = vrot.slane %v180, %v879
    %v881 = vmul.f32 %v863, %v880
    %v882 = vmul.f32 %v867, %v880
    %v883 = vmul.f32 %v871, %v880
    %v884 = vmul.f32 %v875, %v880
    %v885 = vadd.f32 %v857, %v881
    %v886 = vadd.f32 %v858, %v882
    %v887 = vadd.f32 %v859, %v883
    %v888 = vadd.f32 %v860, %v884
    %889 = vset.pattern.permute.xlu0 25
    %890 = vperm.xlu0 %889, %v181
    %v891 = vpop.permute.xlu0 %890
    %893 = vset.pattern.permute.xlu0 25
    %894 = vperm.xlu0 %893, %v182
    %v895 = vpop.permute.xlu0 %894
    %897 = vset.pattern.permute.xlu0 25
    %898 = vperm.xlu0 %897, %v183
    %v899 = vpop.permute.xlu0 %898
    %901 = vset.pattern.permute.xlu0 25
    %902 = vperm.xlu0 %901, %v184
    %v903 = vpop.permute.xlu0 %902
    %v905 = vlaneseq
    %v906 = vshrl.u32 %v905, 7
    %v907 = vsub.s32 1, %v906
    %v908 = vrot.slane %v180, %v907
    %v909 = vmul.f32 %v891, %v908
    %v910 = vmul.f32 %v895, %v908
    %v911 = vmul.f32 %v899, %v908
    %v912 = vmul.f32 %v903, %v908
    %v913 = vadd.f32 %v885, %v909
    %v914 = vadd.f32 %v886, %v910
    %v915 = vadd.f32 %v887, %v911
    %v916 = vadd.f32 %v888, %v912
    %917 = vset.pattern.permute.xlu0 26
    %918 = vperm.xlu0 %917, %v181
    %v919 = vpop.permute.xlu0 %918
    %921 = vset.pattern.permute.xlu0 26
    %922 = vperm.xlu0 %921, %v182
    %v923 = vpop.permute.xlu0 %922
    %925 = vset.pattern.permute.xlu0 26
    %926 = vperm.xlu0 %925, %v183
    %v927 = vpop.permute.xlu0 %926
    %929 = vset.pattern.permute.xlu0 26
    %930 = vperm.xlu0 %929, %v184
    %v931 = vpop.permute.xlu0 %930
    %v933 = vlaneseq
    %v934 = vshrl.u32 %v933, 7
    %v935 = vsub.s32 2, %v934
    %v936 = vrot.slane %v180, %v935
    %v937 = vmul.f32 %v919, %v936
    %v938 = vmul.f32 %v923, %v936
    %v939 = vmul.f32 %v927, %v936
    %v940 = vmul.f32 %v931, %v936
    %v941 = vadd.f32 %v913, %v937
    %v942 = vadd.f32 %v914, %v938
    %v943 = vadd.f32 %v915, %v939
    %v944 = vadd.f32 %v916, %v940
    %945 = vset.pattern.permute.xlu0 27
    %946 = vperm.xlu0 %945, %v181
    %v947 = vpop.permute.xlu0 %946
    %949 = vset.pattern.permute.xlu0 27
    %950 = vperm.xlu0 %949, %v182
    %v951 = vpop.permute.xlu0 %950
    %953 = vset.pattern.permute.xlu0 27
    %954 = vperm.xlu0 %953, %v183
    %v955 = vpop.permute.xlu0 %954
    %957 = vset.pattern.permute.xlu0 27
    %958 = vperm.xlu0 %957, %v184
    %v959 = vpop.permute.xlu0 %958
    %v961 = vlaneseq
    %v962 = vshrl.u32 %v961, 7
    %v963 = vsub.s32 3, %v962
    %v964 = vrot.slane %v180, %v963
    %v965 = vmul.f32 %v947, %v964
    %v966 = vmul.f32 %v951, %v964
    %v967 = vmul.f32 %v955, %v964
    %v968 = vmul.f32 %v959, %v964
    %v969 = vadd.f32 %v941, %v965
    %v970 = vadd.f32 %v942, %v966
    %v971 = vadd.f32 %v943, %v967
    %v972 = vadd.f32 %v944, %v968
    %973 = vset.pattern.permute.xlu0 28
    %974 = vperm.xlu0 %973, %v181
    %v975 = vpop.permute.xlu0 %974
    %977 = vset.pattern.permute.xlu0 28
    %978 = vperm.xlu0 %977, %v182
    %v979 = vpop.permute.xlu0 %978
    %981 = vset.pattern.permute.xlu0 28
    %982 = vperm.xlu0 %981, %v183
    %v983 = vpop.permute.xlu0 %982
    %985 = vset.pattern.permute.xlu0 28
    %986 = vperm.xlu0 %985, %v184
    %v987 = vpop.permute.xlu0 %986
    %v989 = vlaneseq
    %v990 = vshrl.u32 %v989, 7
    %v991 = vsub.s32 4, %v990
    %v992 = vrot.slane %v180, %v991
    %v993 = vmul.f32 %v975, %v992
    %v994 = vmul.f32 %v979, %v992
    %v995 = vmul.f32 %v983, %v992
    %v996 = vmul.f32 %v987, %v992
    %v997 = vadd.f32 %v969, %v993
    %v998 = vadd.f32 %v970, %v994
    %v999 = vadd.f32 %v971, %v995
    %v1000 = vadd.f32 %v972, %v996
    %1001 = vset.pattern.permute.xlu0 29
    %1002 = vperm.xlu0 %1001, %v181
    %v1003 = vpop.permute.xlu0 %1002
    %1005 = vset.pattern.permute.xlu0 29
    %1006 = vperm.xlu0 %1005, %v182
    %v1007 = vpop.permute.xlu0 %1006
    %1009 = vset.pattern.permute.xlu0 29
    %1010 = vperm.xlu0 %1009, %v183
    %v1011 = vpop.permute.xlu0 %1010
    %1013 = vset.pattern.permute.xlu0 29
    %1014 = vperm.xlu0 %1013, %v184
    %v1015 = vpop.permute.xlu0 %1014
    %v1017 = vlaneseq
    %v1018 = vshrl.u32 %v1017, 7
    %v1019 = vsub.s32 5, %v1018
    %v1020 = vrot.slane %v180, %v1019
    %v1021 = vmul.f32 %v1003, %v1020
    %v1022 = vmul.f32 %v1007, %v1020
    %v1023 = vmul.f32 %v1011, %v1020
    %v1024 = vmul.f32 %v1015, %v1020
    %v1025 = vadd.f32 %v997, %v1021
    %v1026 = vadd.f32 %v998, %v1022
    %v1027 = vadd.f32 %v999, %v1023
    %v1028 = vadd.f32 %v1000, %v1024
    %1029 = vset.pattern.permute.xlu0 30
    %1030 = vperm.xlu0 %1029, %v181
    %v1031 = vpop.permute.xlu0 %1030
    %1033 = vset.pattern.permute.xlu0 30
    %1034 = vperm.xlu0 %1033, %v182
    %v1035 = vpop.permute.xlu0 %1034
    %1037 = vset.pattern.permute.xlu0 30
    %1038 = vperm.xlu0 %1037, %v183
    %v1039 = vpop.permute.xlu0 %1038
    %1041 = vset.pattern.permute.xlu0 30
    %1042 = vperm.xlu0 %1041, %v184
    %v1043 = vpop.permute.xlu0 %1042
    %v1045 = vlaneseq
    %v1046 = vshrl.u32 %v1045, 7
    %v1047 = vsub.s32 6, %v1046
    %v1048 = vrot.slane %v180, %v1047
    %v1049 = vmul.f32 %v1031, %v1048
    %v1050 = vmul.f32 %v1035, %v1048
    %v1051 = vmul.f32 %v1039, %v1048
    %v1052 = vmul.f32 %v1043, %v1048
    %v1053 = vadd.f32 %v1025, %v1049
    %v1054 = vadd.f32 %v1026, %v1050
    %v1055 = vadd.f32 %v1027, %v1051
    %v1056 = vadd.f32 %v1028, %v1052
    %1057 = vset.pattern.permute.xlu0 31
    %1058 = vperm.xlu0 %1057, %v181
    %v1059 = vpop.permute.xlu0 %1058
    %1061 = vset.pattern.permute.xlu0 31
    %1062 = vperm.xlu0 %1061, %v182
    %v1063 = vpop.permute.xlu0 %1062
    %1065 = vset.pattern.permute.xlu0 31
    %1066 = vperm.xlu0 %1065, %v183
    %v1067 = vpop.permute.xlu0 %1066
    %1069 = vset.pattern.permute.xlu0 31
    %1070 = vperm.xlu0 %1069, %v184
    %v1071 = vpop.permute.xlu0 %1070
    %v1073 = vlaneseq
    %v1074 = vshrl.u32 %v1073, 7
    %v1075 = vsub.s32 7, %v1074
    %v1076 = vrot.slane %v180, %v1075
    %v1077 = vmul.f32 %v1059, %v1076
    %v1078 = vmul.f32 %v1063, %v1076
    %v1079 = vmul.f32 %v1067, %v1076
    %v1080 = vmul.f32 %v1071, %v1076
    %v1081 = vadd.f32 %v1053, %v1077
    %v1082 = vadd.f32 %v1054, %v1078
    %v1083 = vadd.f32 %v1055, %v1079
    %v1084 = vadd.f32 %v1056, %v1080
    %v1085 = vld [vmem:[%s4] sm:$0xff]
    %v1086 = vld [vmem:[%s4 + $0x8] sm:$0xff]
    %v1087 = vld [vmem:[%s4 + $0x10] sm:$0xff]
    %v1088 = vld [vmem:[%s4 + $0x18] sm:$0xff]
    %1090 = vset.pattern.permute.xlu0 0
    %1091 = vperm.xlu0 %1090, %v1085
    %v1092 = vpop.permute.xlu0 %1091
    %1095 = vset.pattern.permute.xlu0 0
    %1096 = vperm.xlu0 %1095, %v1086
    %v1097 = vpop.permute.xlu0 %1096
    %1100 = vset.pattern.permute.xlu0 0
    %1101 = vperm.xlu0 %1100, %v1087
    %v1102 = vpop.permute.xlu0 %1101
    %1105 = vset.pattern.permute.xlu0 0
    %1106 = vperm.xlu0 %1105, %v1088
    %v1107 = vpop.permute.xlu0 %1106
    %v1109 = vadd.f32 %v1081, %v1092
    %v1110 = vadd.f32 %v1082, %v1097
    %v1111 = vadd.f32 %v1083, %v1102
    %v1112 = vadd.f32 %v1084, %v1107
    %v1113 = vmax.f32 %v1109, 0.0
    %v1114 = vmax.f32 %v1110, 0.0
    %v1115 = vmax.f32 %v1111, 0.0
    %v1116 = vmax.f32 %v1112, 0.0
    %v1117 = vld [vmem:[%s5] sm:$0xff]
    %v1118 = vld [vmem:[%s5 + $0x8] sm:$0xff]
    %v1119 = vld [vmem:[%s5 + $0x10] sm:$0xff]
    %v1120 = vld [vmem:[%s5 + $0x18] sm:$0xff]
    %1122 = vset.pattern.permute.xlu0 0
    %1123 = vperm.xlu0 %1122, %v1117
    %v1124 = vpop.permute.xlu0 %1123
    %1127 = vset.pattern.permute.xlu0 0
    %1128 = vperm.xlu0 %1127, %v1118
    %v1129 = vpop.permute.xlu0 %1128
    %1132 = vset.pattern.permute.xlu0 0
    %1133 = vperm.xlu0 %1132, %v1119
    %v1134 = vpop.permute.xlu0 %1133
    %1137 = vset.pattern.permute.xlu0 0
    %1138 = vperm.xlu0 %1137, %v1120
    %v1139 = vpop.permute.xlu0 %1138
    %v1141 = vmul.f32 %v1113, %v1124
    %v1142 = vmul.f32 %v1114, %v1129
    %v1143 = vmul.f32 %v1115, %v1134
    %v1144 = vmul.f32 %v1116, %v1139
    %v1145 = vadd.f32 %v1141, %v1142
    %v1146 = vadd.f32 %v1145, %v1143
    %v1147 = vadd.f32 %v1146, %v1144
    %v1148 = vrot.slane %v1147, 4
    %v1149 = vadd.f32 %v1147, %v1148
    %v1150 = vrot.slane %v1149, 2
    %v1151 = vadd.f32 %v1149, %v1150
    %v1152 = vrot.slane %v1151, 1
    %v1153 = vadd.f32 %v1151, %v1152
    %s1154 = sld [smem:[#allocation2]]
    %v1155 = vstv %s1154
    %v1156 = vadd.f32 %v1153, %v1155
    %1157 = vst [vmem:[#allocation3] sm:$0x1] %v1156
    // Predicated region
    $region30: #{tpu_custom_call.1} parent=1 // pred_check
      _
    $region31: #{tpu_custom_call.1} parent=1 // pred_check_branch
      %1159 = sbr.rel (0) target = $region33
    $region32: #{tpu_custom_call.1} parent=1 // pred_region
      %s1161 = ssub.s32 16, 16
      %1162 = vsyncadd [#allocation4], %s1161
      %s1164 = sshll.u32 [#allocation3], 4
      %s1165 = int_to_ptr.vmem [resolvable:$true] %s1164
      %1167 = dma.vmem_to_hbm [thread:$0]  %s1165, 16, %s7, [#allocation4]
    $region33: #{tpu_custom_call.1} parent=1 // pred_fallthru
      _
    // Predicated region
    $region34: #{tpu_custom_call.1} parent=1 // pred_check
      _
    $region35: #{tpu_custom_call.1} parent=1 // pred_check_branch
      %1169 = sbr.rel (0) target = $region37
    $region36: #{tpu_custom_call.1} parent=1 // pred_region
      %1170 = dma.done [#allocation4], 16
    $region37: #{tpu_custom_call.1} parent=1 // pred_fallthru
      _
    %1171 = vsyncpa [#allocation4], 1

</llo_original>
